<compile_context>
chip_gen: v6e
topology: v6e:2x2x1
jax: 0.10.0
libtpu: 0.0.40
codegen_flags: <defaults>
</compile_context>

<pallas_src>
import jax
import jax.numpy as jnp
from jax.experimental import pallas as pl
from jax.experimental.pallas import tpu as pltpu


def _round_up(x, m):
    return (x + m - 1) // m * m


def _physical_vmem_bytes():
    """Physical VMEM per TensorCore; falls back to 64 MiB (v7x, the smallest)."""
    try:
        info = pltpu.get_tpu_info()
        v = getattr(info, "vmem_capacity_bytes", None)
        if v:
            return int(v)
    except Exception:
        pass
    return 64 * 1024 * 1024


# ---------------------------------------------------------------------------
# Kernels
# ---------------------------------------------------------------------------
def _gated_kernel_no_transform(word_ref, rel_ref, relg_ref, wg_ref, o_ref):
    # word_ref: (tm, H); rel_ref/relg_ref: (1, H); wg_ref: (H, H) (in, out)
    word = word_ref[...]
    gate_logits = jnp.dot(word, wg_ref[...], preferred_element_type=jnp.float32)
    g = jax.nn.sigmoid(gate_logits + relg_ref[...])   # relg = rel @ Wg_rel.T + b_g
    # g*rel + (1-g)*word  ==  word + g*(rel - word)
    o_ref[...] = (word + g * (rel_ref[...] - word)).astype(o_ref.dtype)


def _gated_kernel_transform(word_ref, relg_ref, relt_ref, wg_ref, wt_ref, o_ref):
    # word_ref: (tm, H); relg/relt: (1, H); wg/wt: (H, H) (in, out)
    word = word_ref[...]
    g = jax.nn.sigmoid(
        jnp.dot(word, wg_ref[...], preferred_element_type=jnp.float32)
        + relg_ref[...])
    t = jnp.tanh(
        jnp.dot(word, wt_ref[...], preferred_element_type=jnp.float32)
        + relt_ref[...])
    # g*t + (1-g)*word  ==  word + g*(t - word)
    o_ref[...] = (word + g * (t - word)).astype(o_ref.dtype)


# ---------------------------------------------------------------------------
# One-time parameter preparation (hoisted out of the per-call path)
# ---------------------------------------------------------------------------
def prepare_gated_params(params, transform=False):
    """Split the PyTorch (out, 2H) weights into rel/word halves, transposed to
    (in, out) so the kernel runs plain `word @ W` matmuls.  Call once."""
    wg = jnp.asarray(params["gate_w"])          # (H, 2H), PyTorch (out, in)
    bg = jnp.asarray(params["gate_b"])          # (H,)
    H = wg.shape[0]
    prep = {
        "wg_rel_t": wg[:, :H].T,                # (H, H)  rel-input half
        "wg_word_t": wg[:, H:].T,               # (H, H)  word-input half
        "bg": bg,
    }
    if transform:
        wt = jnp.asarray(params["transform_w"])
        bt = jnp.asarray(params["transform_b"])
        prep["wt_rel_t"] = wt[:, :H].T
        prep["wt_word_t"] = wt[:, H:].T
        prep["bt"] = bt
    return prep


# ---------------------------------------------------------------------------
# Wrapper
# ---------------------------------------------------------------------------
def gated_combination(relation_hidden_state, word_hidden_states, prep, tm=None):
    """
    relation_hidden_state: (B, 1, H)
    word_hidden_states   : (B, S, H)
    prep                 : output of prepare_gated_params()
    """
    B, S, H = word_hidden_states.shape
    transform = "wt_word_t" in prep
    out_dtype = word_hidden_states.dtype
    itemsize = jnp.dtype(out_dtype).itemsize
    w_itemsize = jnp.dtype(prep["wg_word_t"].dtype).itemsize
    n_w = 2 if transform else 1

    # --- per-call (tiny) relation projections: rel @ W_rel.T + b ------------
    rel2 = relation_hidden_state.reshape(B, H)
    relg = (jnp.dot(rel2, prep["wg_rel_t"], preferred_element_type=jnp.float32)
            + prep["bg"].astype(jnp.float32))[:, None, :]            # (B,1,H)
    if transform:
        relt = (jnp.dot(rel2, prep["wt_rel_t"], preferred_element_type=jnp.float32)
                + prep["bt"].astype(jnp.float32))[:, None, :]        # (B,1,H)

    # --- row tile over the sequence axis -------------------------------------
    sub = {1: 32, 2: 16}.get(itemsize, 8)   # sublane multiple for the out dtype
    if tm is None:
        tm = 1024
    tm = max(sub, min(_round_up(tm, sub), _round_up(S, sub)))

    phys_vmem = _physical_vmem_bytes()
    limit_cap = int(0.75 * phys_vmem)       # headroom for compiler scratch

    def footprint(t):
        # double-buffered word-in + out tiles, (conservatively 2x) weights,
        # double-buffered rel rows.
        return (4 * t * H * itemsize
                + 2 * n_w * H * H * w_itemsize
                + 4 * (n_w + 1) * H * 4
                + (1 << 16))

    while tm > sub and footprint(tm) + (8 << 20) > limit_cap:
        tm = max(sub, _round_up(tm // 2, sub))
    vmem_limit = int(min(limit_cap, max(2 * footprint(tm) + (8 << 20), 32 << 20)))

    grid = (B, pl.cdiv(S, tm))
    word_spec = pl.BlockSpec((None, tm, H), lambda b, i: (b, i, 0))
    out_spec = pl.BlockSpec((None, tm, H), lambda b, i: (b, i, 0))
    row_spec = pl.BlockSpec((None, 1, H), lambda b, i: (b, 0, 0))

    cost = pl.CostEstimate(
        flops=2 * B * S * H * H * n_w + 8 * B * S * H,
        transcendentals=n_w * B * S * H,
        bytes_accessed=(2 * B * S * H * itemsize + n_w * H * H * w_itemsize
                        + (n_w + 1) * B * H * 4))

    def _call(single_buffer_weights):
        w_kwargs = {}
        if single_buffer_weights and hasattr(pl, "Buffered"):
            # resident weights: block index never changes -> one VMEM buffer
            w_kwargs["pipeline_mode"] = pl.Buffered(1)
        w_spec = pl.BlockSpec((H, H), lambda b, i: (0, 0), **w_kwargs)
        if transform:
            kernel = _gated_kernel_transform
            args = (word_hidden_states, relg, relt,
                    prep["wg_word_t"], prep["wt_word_t"])
            in_specs = [word_spec, row_spec, row_spec, w_spec, w_spec]
        else:
            kernel = _gated_kernel_no_transform
            args = (word_hidden_states, relation_hidden_state, relg,
                    prep["wg_word_t"])
            in_specs = [word_spec, row_spec, row_spec, w_spec]
        return pl.pallas_call(
            kernel,
            out_shape=jax.ShapeDtypeStruct((B, S, H), out_dtype),
            grid_spec=pltpu.PrefetchScalarGridSpec(
                num_scalar_prefetch=0, grid=grid,
                in_specs=in_specs, out_specs=out_spec),
            compiler_params=pltpu.CompilerParams(
                dimension_semantics=("parallel", "parallel"),
                vmem_limit_bytes=vmem_limit),
            cost_estimate=cost,
        )(*args)

    try:
        return _call(True)
    except Exception:
        # pipeline_mode / pl.Buffered(1) not supported on this jax version:
        # fall back to default double-buffered constants (correctness identical).
        return _call(False)


# ---------------------------------------------------------------------------
# Pure-JAX reference (mirrors the PyTorch forward exactly)
# ---------------------------------------------------------------------------
def gated_combination_ref(rel, words, params, transform=False):
    B, S, H = words.shape
    combined = jnp.concatenate(
        [jnp.broadcast_to(rel, (B, S, H)), words], axis=-1)
    g = jax.nn.sigmoid(combined @ params["gate_w"].T + params["gate_b"])
    if transform:
        t = jnp.tanh(combined @ params["transform_w"].T + params["transform_b"])
    else:
        t = jnp.broadcast_to(rel, (B, S, H))
    return g * t + (1.0 - g) * words


# ---------------------------------------------------------------------------
# Main
# ---------------------------------------------------------------------------
if __name__ == "__main__":
    B, S, H = 2, 8, 32
    key = jax.random.PRNGKey(0)
    k1, k2, k3, k4, k5, k6 = jax.random.split(key, 6)

    relation = jax.random.normal(k1, (B, 1, H), dtype=jnp.float32)
    words = jax.random.normal(k2, (B, S, H), dtype=jnp.float32)

    bound = 1.0 / jnp.sqrt(2.0 * H)
    params = {
        "gate_w": jax.random.uniform(k3, (H, 2 * H), jnp.float32, -bound, bound),
        "gate_b": jax.random.uniform(k4, (H,), jnp.float32, -bound, bound),
        "transform_w": jax.random.uniform(k5, (H, 2 * H), jnp.float32, -bound, bound),
        "transform_b": jax.random.uniform(k6, (H,), jnp.float32, -bound, bound),
    }

    ok = True
    for transform in (False, True):
        prep = prepare_gated_params(params, transform=transform)   # one-time
        out = gated_combination(relation, words, prep)
        out = jax.block_until_ready(out)
        ref = gated_combination_ref(relation, words, params, transform=transform)
        if not jnp.allclose(out, ref, atol=1e-5, rtol=1e-5):
            ok = False
            print(f"MISMATCH (transform={transform}): "
                  f"max err {jnp.max(jnp.abs(out - ref))}")

    if ok:
        print("KERNEL_OK")
</pallas_src>

<mosaic_0001>
module attributes {stable_mosaic.version = 11 : i64} {
  func.func @_gated_kernel_no_transform(%arg0: i32, %arg1: i32, %arg2: memref<1x8x32xf32, #tpu.memory_space<vmem>>, %arg3: memref<1x1x32xf32, #tpu.memory_space<vmem>>, %arg4: memref<1x1x32xf32, #tpu.memory_space<vmem>>, %arg5: memref<32x32xf32, #tpu.memory_space<vmem>>, %arg6: memref<1x8x32xf32, #tpu.memory_space<vmem>>) attributes {dimension_semantics = [#tpu.dimension_semantics<parallel>, #tpu.dimension_semantics<parallel>], iteration_bounds = array<i64: 2, 1>, scalar_prefetch = 0 : i64, scratch_operands = 0 : i64, tpu.core_type = #tpu.core_type<tc>, window_params = [{transform_indices = @transform_0, window_bounds = array<i64: 1, 8, 32>}, {transform_indices = @transform_1, window_bounds = array<i64: 1, 1, 32>}, {transform_indices = @transform_2, window_bounds = array<i64: 1, 1, 32>}, {pipeline_mode = #tpu.pipeline_mode<synchronous>, transform_indices = @transform_3, window_bounds = array<i64: 32, 32>}, {transform_indices = @transform_4, window_bounds = array<i64: 1, 8, 32>}]} {
    %c0 = arith.constant 0 : index
    %c0_0 = arith.constant 0 : index
    %c0_1 = arith.constant 0 : index
    %0 = vector.load %arg2[%c0, %c0_0, %c0_1] : memref<1x8x32xf32, #tpu.memory_space<vmem>>, vector<1x8x32xf32>
    %1 = vector.shape_cast %0 : vector<1x8x32xf32> to vector<8x32xf32>
    %c0_2 = arith.constant 0 : index
    %c0_3 = arith.constant 0 : index
    %2 = vector.load %arg5[%c0_2, %c0_3] : memref<32x32xf32, #tpu.memory_space<vmem>>, vector<32x32xf32>
    %cst = arith.constant dense<0.000000e+00> : vector<8x32xf32>
    %3 = tpu.matmul %1, %2, %cst {dimension_numbers = #tpu.dot_dimension_numbers<[1], [0], [0], [1], [0, 0, 1, 1], [], []>} : vector<8x32xf32>, vector<32x32xf32>, vector<8x32xf32> -> vector<8x32xf32>
    %c0_4 = arith.constant 0 : index
    %c0_5 = arith.constant 0 : index
    %c0_6 = arith.constant 0 : index
    %4 = vector.load %arg4[%c0_4, %c0_5, %c0_6] : memref<1x1x32xf32, #tpu.memory_space<vmem>>, vector<1x1x32xf32>
    %5 = vector.shape_cast %4 : vector<1x1x32xf32> to vector<1x32xf32>
    %6 = vector.broadcast %5 : vector<1x32xf32> to vector<8x32xf32>
    %7 = arith.addf %3, %6 : vector<8x32xf32>
    %8 = arith.negf %7 : vector<8x32xf32>
    %9 = math.exp %8 : vector<8x32xf32>
    %cst_7 = arith.constant 1.000000e+00 : f32
    %10 = vector.broadcast %cst_7 : f32 to vector<8x32xf32>
    %11 = arith.addf %10, %9 : vector<8x32xf32>
    %12 = arith.divf %10, %11 : vector<8x32xf32>
    %c0_8 = arith.constant 0 : index
    %c0_9 = arith.constant 0 : index
    %c0_10 = arith.constant 0 : index
    %13 = vector.load %arg3[%c0_8, %c0_9, %c0_10] : memref<1x1x32xf32, #tpu.memory_space<vmem>>, vector<1x1x32xf32>
    %14 = vector.shape_cast %13 : vector<1x1x32xf32> to vector<1x32xf32>
    %15 = vector.broadcast %14 : vector<1x32xf32> to vector<8x32xf32>
    %16 = arith.subf %15, %1 : vector<8x32xf32>
    %17 = arith.mulf %12, %16 : vector<8x32xf32>
    %18 = arith.addf %1, %17 : vector<8x32xf32>
    %c0_11 = arith.constant 0 : index
    %c0_12 = arith.constant 0 : index
    %c0_13 = arith.constant 0 : index
    %19 = vector.load %arg6[%c0_11, %c0_12, %c0_13] : memref<1x8x32xf32, #tpu.memory_space<vmem>>, vector<1x8x32xf32>
    %20 = vector.shape_cast %19 : vector<1x8x32xf32> to vector<8x32xf32>
    %21 = vector.shape_cast %18 : vector<8x32xf32> to vector<1x8x32xf32>
    tpu.vector_store %arg6[%c0_11, %c0_12, %c0_13], %21 {strides = array<i32>} : memref<1x8x32xf32, #tpu.memory_space<vmem>>, vector<1x8x32xf32>,
    return
  }
  func.func @transform_0(%arg0: i32, %arg1: i32) -> (i32, i32, i32) {
    %c0_i32 = arith.constant 0 : i32
    %c0_i32_0 = arith.constant 0 : i32
    return %arg0, %arg1, %c0_i32 : i32, i32, i32
  }
  func.func @transform_1(%arg0: i32, %arg1: i32) -> (i32, i32, i32) {
    %c0_i32 = arith.constant 0 : i32
    %c0_i32_0 = arith.constant 0 : i32
    %c0_i32_1 = arith.constant 0 : i32
    return %arg0, %c0_i32, %c0_i32_0 : i32, i32, i32
  }
  func.func @transform_2(%arg0: i32, %arg1: i32) -> (i32, i32, i32) {
    %c0_i32 = arith.constant 0 : i32
    %c0_i32_0 = arith.constant 0 : i32
    %c0_i32_1 = arith.constant 0 : i32
    return %arg0, %c0_i32, %c0_i32_0 : i32, i32, i32
  }
  func.func @transform_3(%arg0: i32, %arg1: i32) -> (i32, i32) {
    %c0_i32 = arith.constant 0 : i32
    %c0_i32_0 = arith.constant 0 : i32
    %c0_i32_1 = arith.constant 0 : i32
    return %c0_i32, %c0_i32_0 : i32, i32
  }
  func.func @transform_4(%arg0: i32, %arg1: i32) -> (i32, i32, i32) {
    %c0_i32 = arith.constant 0 : i32
    %c0_i32_0 = arith.constant 0 : i32
    return %arg0, %arg1, %c0_i32 : i32, i32, i32
  }
}

module attributes {stable_mosaic.version = 11 : i64} {
  func.func @_gated_kernel_no_transform(%arg0: i32, %arg1: i32, %arg2: memref<1x8x32xf32, #tpu.memory_space<vmem>>, %arg3: memref<1x1x32xf32, #tpu.memory_space<vmem>>, %arg4: memref<1x1x32xf32, #tpu.memory_space<vmem>>, %arg5: memref<32x32xf32, #tpu.memory_space<vmem>>, %arg6: memref<1x8x32xf32, #tpu.memory_space<vmem>>) attributes {dimension_semantics = [#tpu.dimension_semantics<parallel>, #tpu.dimension_semantics<parallel>], iteration_bounds = array<i64: 2, 1>, scalar_prefetch = 0 : i64, scratch_operands = 0 : i64, tpu.core_type = #tpu.core_type<tc>, window_params = [{transform_indices = @transform_0, window_bounds = array<i64: 1, 8, 32>}, {transform_indices = @transform_1, window_bounds = array<i64: 1, 1, 32>}, {transform_indices = @transform_2, window_bounds = array<i64: 1, 1, 32>}, {pipeline_mode = #tpu.pipeline_mode<synchronous>, transform_indices = @transform_3, window_bounds = array<i64: 32, 32>}, {transform_indices = @transform_4, window_bounds = array<i64: 1, 8, 32>}]} {
    %c0 = arith.constant 0 : index
    %c0_0 = arith.constant 0 : index
    %c0_1 = arith.constant 0 : index
    %0 = vector.load %arg2[%c0, %c0_0, %c0_1] : memref<1x8x32xf32, #tpu.memory_space<vmem>>, vector<1x8x32xf32>
    %1 = vector.shape_cast %0 : vector<1x8x32xf32> to vector<8x32xf32>
    %c0_2 = arith.constant 0 : index
    %c0_3 = arith.constant 0 : index
    %2 = vector.load %arg5[%c0_2, %c0_3] : memref<32x32xf32, #tpu.memory_space<vmem>>, vector<32x32xf32>
    %cst = arith.constant dense<0.000000e+00> : vector<8x32xf32>
    %3 = tpu.matmul %1, %2, %cst {dimension_numbers = #tpu.dot_dimension_numbers<[1], [0], [0], [1], [0, 0, 1, 1], [], []>} : vector<8x32xf32>, vector<32x32xf32>, vector<8x32xf32> -> vector<8x32xf32>
    %c0_4 = arith.constant 0 : index
    %c0_5 = arith.constant 0 : index
    %c0_6 = arith.constant 0 : index
    %4 = vector.load %arg4[%c0_4, %c0_5, %c0_6] : memref<1x1x32xf32, #tpu.memory_space<vmem>>, vector<1x1x32xf32>
    %5 = vector.shape_cast %4 : vector<1x1x32xf32> to vector<1x32xf32>
    %6 = vector.broadcast %5 : vector<1x32xf32> to vector<8x32xf32>
    %7 = arith.addf %3, %6 : vector<8x32xf32>
    %8 = arith.negf %7 : vector<8x32xf32>
    %9 = math.exp %8 : vector<8x32xf32>
    %cst_7 = arith.constant 1.000000e+00 : f32
    %10 = vector.broadcast %cst_7 : f32 to vector<8x32xf32>
    %11 = arith.addf %10, %9 : vector<8x32xf32>
    %12 = arith.divf %10, %11 : vector<8x32xf32>
    %c0_8 = arith.constant 0 : index
    %c0_9 = arith.constant 0 : index
    %c0_10 = arith.constant 0 : index
    %13 = vector.load %arg3[%c0_8, %c0_9, %c0_10] : memref<1x1x32xf32, #tpu.memory_space<vmem>>, vector<1x1x32xf32>
    %14 = vector.shape_cast %13 : vector<1x1x32xf32> to vector<1x32xf32>
    %15 = vector.broadcast %14 : vector<1x32xf32> to vector<8x32xf32>
    %16 = arith.subf %15, %1 : vector<8x32xf32>
    %17 = arith.mulf %12, %16 : vector<8x32xf32>
    %18 = arith.addf %1, %17 : vector<8x32xf32>
    %c0_11 = arith.constant 0 : index
    %c0_12 = arith.constant 0 : index
    %c0_13 = arith.constant 0 : index
    %19 = vector.load %arg6[%c0_11, %c0_12, %c0_13] : memref<1x8x32xf32, #tpu.memory_space<vmem>>, vector<1x8x32xf32>
    %20 = vector.shape_cast %19 : vector<1x8x32xf32> to vector<8x32xf32>
    %21 = vector.shape_cast %18 : vector<8x32xf32> to vector<1x8x32xf32>
    tpu.vector_store %arg6[%c0_11, %c0_12, %c0_13], %21 {strides = array<i32>} : memref<1x8x32xf32, #tpu.memory_space<vmem>>, vector<1x8x32xf32>,
    return
  }
  func.func @transform_0(%arg0: i32, %arg1: i32) -> (i32, i32, i32) {
    %c0_i32 = arith.constant 0 : i32
    %c0_i32_0 = arith.constant 0 : i32
    return %arg0, %arg1, %c0_i32 : i32, i32, i32
  }
  func.func @transform_1(%arg0: i32, %arg1: i32) -> (i32, i32, i32) {
    %c0_i32 = arith.constant 0 : i32
    %c0_i32_0 = arith.constant 0 : i32
    %c0_i32_1 = arith.constant 0 : i32
    return %arg0, %c0_i32, %c0_i32_0 : i32, i32, i32
  }
  func.func @transform_2(%arg0: i32, %arg1: i32) -> (i32, i32, i32) {
    %c0_i32 = arith.constant 0 : i32
    %c0_i32_0 = arith.constant 0 : i32
    %c0_i32_1 = arith.constant 0 : i32
    return %arg0, %c0_i32, %c0_i32_0 : i32, i32, i32
  }
  func.func @transform_3(%arg0: i32, %arg1: i32) -> (i32, i32) {
    %c0_i32 = arith.constant 0 : i32
    %c0_i32_0 = arith.constant 0 : i32
    %c0_i32_1 = arith.constant 0 : i32
    return %c0_i32, %c0_i32_0 : i32, i32
  }
  func.func @transform_4(%arg0: i32, %arg1: i32) -> (i32, i32, i32) {
    %c0_i32 = arith.constant 0 : i32
    %c0_i32_0 = arith.constant 0 : i32
    return %arg0, %arg1, %c0_i32 : i32, i32, i32
  }
}

</mosaic_0001>

<llo_original>
// kernel: tpu_custom_call.1
$region0: #{tpu_custom_call.1}
  #allocation0 [shape = 'u32[]', space=smem, size = 0x4, offset = 0x4, fixed_abs, tag = 'smem constant byte address 0x4 - core index']
  #allocation1 [shape = 'u32[144,128]{1,0:T(1,128)}', space=vmem, size = 0x12000, scoped, tag = 'internal scratch']
  %s0 = inlined_call_operand.hbm [shape: f32[2,8,32], index: 0, kind: input, shape index: {}]
  %s1 = inlined_call_operand.hbm [shape: f32[2,1,32], index: 1, kind: input, shape index: {}]
  %s2 = inlined_call_operand.vmem [shape: f32[2,1,32], index: 2, kind: input, shape index: {}]
  %s3 = inlined_call_operand.hbm [shape: f32[32,32], index: 3, kind: input, shape index: {}]
  %s4 = inlined_call_operand.hbm [shape: f32[2,8,32], index: 4, kind: output, shape index: {}]
  %s5 = sld [smem:[#allocation0]]
  $region61: #{tpu_custom_call.1} parent=0
    _
  %s7 = ssub.s32 1, %s5
  %s8 = scalar_select 0, %s7, %s5
  $region1: #{tpu_custom_call.1} parent=0
    #allocation2 [shape = 'u8[8192]{0}', space=vmem, size = 0x2000, scoped, tag = 'input window, operand 0']
    #allocation3 [shape = 's32[2]{0}', space=sflag, size = 0x8, scoped, tag = 'scoped memory for tpu_custom_call.1']
    #allocation4 [shape = 's32[2]{0}', space=sflag, size = 0x8, scoped, tag = 'scoped memory for tpu_custom_call.1']
    #allocation5 [shape = 'u8[1024]{0}', space=vmem, size = 0x400, scoped, tag = 'input window, operand 1']
    #allocation6 [shape = 's32[2]{0}', space=sflag, size = 0x8, scoped, tag = 'scoped memory for tpu_custom_call.1']
    #allocation7 [shape = 'u8[16384]{0}', space=vmem, size = 0x4000, scoped, tag = 'input window, operand 3, single buffered']
    #allocation8 [shape = 'u8[8192]{0}', space=vmem, size = 0x2000, scoped, tag = 'output window, operand 0']
    %9 = vsyncpa [#allocation3], 0
    %s10 = scalar_lea.sflag [#allocation3], 1
    %11 = vsyncpa %s10, 0
    %12 = vsyncpa [#allocation6], 0
    %s13 = scalar_lea.sflag [#allocation6], 1
    %14 = vsyncpa %s13, 0
    %15 = vsyncpa [#allocation4], 0
    %s16 = scalar_lea.sflag [#allocation4], 1
    %17 = vsyncpa %s16, 0
    loop: start=0, step=1, limit=4
    $region2: #{tpu_custom_call.1} parent=1 // loop_pre_header
      _
    $region3: #{tpu_custom_call.1} parent=1 // loop_header
      %s19 = sphi 0, %s23
      %p20 = scmp.ge.s32.totalorder %s19, 4
      %s26 = sphi 0, %s38
      %s27 = sphi 0, %s34
      %s28 = sphi 0, %s26
      %s29 = sphi 0, %s27
      %s30 = sphi 0, %s28
      %s31 = sphi 0, %s29
      %s43 = sphi 0, %s45
      %s46 = sphi 0, %s43
      %s47 = sphi 0, %s46
      %s63 = sphi 0, %s47
      %s69 = sphi 0, %s71
      %s72 = sphi 0, %s69
      %s73 = sphi 0, %s72
      %s89 = sphi 0, %s73
      %s95 = sphi 0, %s97
      %s98 = sphi 0, %s95
      %s99 = sphi 0, %s98
      %s115 = sphi 0, %s99
      %s119 = sphi 0, %s119
      %s121 = sphi 0, %s119
      %s122 = sphi 0, %s121
      %s136 = sphi 0, %s122
      %s144 = sphi 0, %s146
      %s147 = sphi 0, %s144
      %s148 = sphi 0, %s147
      %s164 = sphi 0, %s148
    $region4: #{tpu_custom_call.1} parent=1 // loop_header_branch
      %22 = sbr.rel (%p20) target = $region8
    $region5: #{tpu_custom_call.1} parent=1 // loop_body
      %s24 = ssub.s32 %s19, 1
      %s25 = ssub.s32 %s19, 2
      %s32 = sadd.s32 1, %s27
      %p33 = scmp.ge.s32.totalorder %s32, 1
      %s34 = scalar_select %p33, 0, %s32
      %s35 = sadd.s32 1, %s26
      %s36 = scalar_select %p33, %s35, %s26
      %p37 = scmp.ge.s32.totalorder %s36, 2
      %s38 = scalar_select %p37, 0, %s36
      %s39 = ssub.s32 %s26, %s38
      %s40 = ssub.s32 %s27, %s34
      %s41 = sor.u32 %s39, %s40
      %p42 = scmp.eq.s32.totalorder %s41, 0
      %s44 = sadd.s32 %s43, 1
      %s45 = scalar_select %p42, %s43, %s44
      %p48 = pneg %p42
      %p49 = scmp.eq.s32.totalorder %s19, 1
      %p50 = por %p48, %p49
      %p51 = scmp.ne.s32.totalorder %s43, %s46
      %p52 = scmp.eq.s32.totalorder %s19, 0
      %p53 = por %p51, %p52
      %p54 = scmp.ne.s32.totalorder %s43, %s46
      %p55 = scmp.eq.s32.totalorder %s24, 1
      %p56 = por %p54, %p55
      %p57 = scmp.ne.s32.totalorder %s46, %s47
      %p58 = scmp.eq.s32.totalorder %s24, 0
      %p59 = por %p57, %p58
      %p60 = scmp.ne.s32.totalorder %s46, %s47
      %p61 = scmp.eq.s32.totalorder %s25, 1
      %p62 = por %p60, %p61
      %p64 = scmp.ne.s32.totalorder %s47, %s63
      %p65 = scmp.eq.s32.totalorder %s25, 0
      %p66 = por %p64, %p65
      %s67 = ssub.s32 %s26, %s38
      %p68 = scmp.eq.s32.totalorder %s67, 0
      %s70 = sadd.s32 %s69, 1
      %s71 = scalar_select %p68, %s69, %s70
      %p74 = pneg %p68
      %p75 = scmp.eq.s32.totalorder %s19, 1
      %p76 = por %p74, %p75
      %p77 = scmp.ne.s32.totalorder %s69, %s72
      %p78 = scmp.eq.s32.totalorder %s19, 0
      %p79 = por %p77, %p78
      %p80 = scmp.ne.s32.totalorder %s69, %s72
      %p81 = scmp.eq.s32.totalorder %s24, 1
      %p82 = por %p80, %p81
      %p83 = scmp.ne.s32.totalorder %s72, %s73
      %p84 = scmp.eq.s32.totalorder %s24, 0
      %p85 = por %p83, %p84
      %p86 = scmp.ne.s32.totalorder %s72, %s73
      %p87 = scmp.eq.s32.totalorder %s25, 1
      %p88 = por %p86, %p87
      %p90 = scmp.ne.s32.totalorder %s73, %s89
      %p91 = scmp.eq.s32.totalorder %s25, 0
      %p92 = por %p90, %p91
      %s93 = ssub.s32 %s26, %s38
      %p94 = scmp.eq.s32.totalorder %s93, 0
      %s96 = sadd.s32 %s95, 1
      %s97 = scalar_select %p94, %s95, %s96
      %p100 = pneg %p94
      %p101 = scmp.eq.s32.totalorder %s19, 1
      %p102 = por %p100, %p101
      %p103 = scmp.ne.s32.totalorder %s95, %s98
      %p104 = scmp.eq.s32.totalorder %s19, 0
      %p105 = por %p103, %p104
      %p106 = scmp.ne.s32.totalorder %s95, %s98
      %p107 = scmp.eq.s32.totalorder %s24, 1
      %p108 = por %p106, %p107
      %p109 = scmp.ne.s32.totalorder %s98, %s99
      %p110 = scmp.eq.s32.totalorder %s24, 0
      %p111 = por %p109, %p110
      %p112 = scmp.ne.s32.totalorder %s98, %s99
      %p113 = scmp.eq.s32.totalorder %s25, 1
      %p114 = por %p112, %p113
      %p116 = scmp.ne.s32.totalorder %s99, %s115
      %p117 = scmp.eq.s32.totalorder %s25, 0
      %p118 = por %p116, %p117
      %s120 = sadd.s32 %s119, 1
      %p123 = scmp.eq.s32.totalorder %s19, 1
      %p124 = scmp.ne.s32.totalorder %s119, %s121
      %p125 = scmp.eq.s32.totalorder %s19, 0
      %p126 = por %p124, %p125
      %p127 = scmp.ne.s32.totalorder %s119, %s121
      %p128 = scmp.eq.s32.totalorder %s24, 1
      %p129 = por %p127, %p128
      %p130 = scmp.ne.s32.totalorder %s121, %s122
      %p131 = scmp.eq.s32.totalorder %s24, 0
      %p132 = por %p130, %p131
      %p133 = scmp.ne.s32.totalorder %s121, %s122
      %p134 = scmp.eq.s32.totalorder %s25, 1
      %p135 = por %p133, %p134
      %p137 = scmp.ne.s32.totalorder %s122, %s136
      %p138 = scmp.eq.s32.totalorder %s25, 0
      %p139 = por %p137, %p138
      %s140 = ssub.s32 %s26, %s38
      %s141 = ssub.s32 %s27, %s34
      %s142 = sor.u32 %s140, %s141
      %p143 = scmp.eq.s32.totalorder %s142, 0
      %s145 = sadd.s32 %s144, 1
      %s146 = scalar_select %p143, %s144, %s145
      %p149 = pneg %p143
      %p150 = scmp.eq.s32.totalorder %s19, 1
      %p151 = por %p149, %p150
      %p152 = scmp.ne.s32.totalorder %s144, %s147
      %p153 = scmp.eq.s32.totalorder %s19, 0
      %p154 = por %p152, %p153
      %p155 = scmp.ne.s32.totalorder %s144, %s147
      %p156 = scmp.eq.s32.totalorder %s24, 1
      %p157 = por %p155, %p156
      %p158 = scmp.ne.s32.totalorder %s147, %s148
      %p159 = scmp.eq.s32.totalorder %s24, 0
      %p160 = por %p158, %p159
      %p161 = scmp.ne.s32.totalorder %s147, %s148
      %p162 = scmp.eq.s32.totalorder %s25, 1
      %p163 = por %p161, %p162
      %p165 = scmp.ne.s32.totalorder %s148, %s164
      %p166 = scmp.eq.s32.totalorder %s25, 0
      %p167 = por %p165, %p166
      %p168 = scmp.le.s32.totalorder 1, %s19
      %p169 = scmp.lt.s32.totalorder %s19, 3
      %p170 = pnand %p168, %p169
      %p171 = pneg %p170
      // Predicated region
      $region9: #{tpu_custom_call.1} parent=5 // pred_check
        _
      $region10: #{tpu_custom_call.1} parent=5 // pred_check_branch
        %173 = sbr.rel (%p170) target = $region12
      $region11: #{tpu_custom_call.1} parent=5 // pred_region
        %s174 = ssub.s32 %s19, 1
        // Predicated region
        $region13: #{tpu_custom_call.1} parent=11 // pred_check
          %p175 = pneg %p132
        $region14: #{tpu_custom_call.1} parent=11 // pred_check_branch
          %177 = sbr.rel (%p175) target = $region16
        $region15: #{tpu_custom_call.1} parent=11 // pred_region
          %s179 = ssub.s32 512, 512
          %180 = vsyncadd [#allocation6], %s179
          %s181 = sshll.u32 [#allocation7], 4
          %s182 = int_to_ptr.vmem [resolvable:$true] %s181
          %187 = dma.hbm_to_vmem [thread:$0]  %s3, 512, %s182, [#allocation6], 128, 128, 8
        $region16: #{tpu_custom_call.1} parent=11 // pred_fallthru
          _
      $region12: #{tpu_custom_call.1} parent=5 // pred_fallthru
        _
      %p188 = scmp.lt.s32.totalorder %s19, 2
      // Predicated region
      $region17: #{tpu_custom_call.1} parent=5 // pred_check
        %p189 = pneg %p188
      $region18: #{tpu_custom_call.1} parent=5 // pred_check_branch
        %191 = sbr.rel (%p189) target = $region20
      $region19: #{tpu_custom_call.1} parent=5 // pred_region
        // Predicated region
        $region21: #{tpu_custom_call.1} parent=19 // pred_check
          %p192 = pneg %p53
        $region22: #{tpu_custom_call.1} parent=19 // pred_check_branch
          %194 = sbr.rel (%p192) target = $region24
        $region23: #{tpu_custom_call.1} parent=19 // pred_region
          %s195 = sand.u32 %s43, 1
          %s196 = scalar_lea.sflag [#allocation3], %s195
          %s197 = sand.u32 %s43, 1
          %s198 = smul.addr %s197, 8
          %s199 = scalar_lea.vmem [#allocation2], %s198
          %s201 = ssub.s32 128, 128
          %202 = vsyncadd %s196, %s201
          %s203 = sadd.s32 %s27, %s26
          %s204 = smul.addr %s203, 128
          %s205 = scalar_lea.hbm %s0, %s204
          %s207 = sshll.u32 %s199, 4
          %s208 = int_to_ptr.vmem [resolvable:$true] %s207
          %210 = dma.hbm_to_vmem [thread:$0]  %s205, 128, %s208, %s196
        $region24: #{tpu_custom_call.1} parent=19 // pred_fallthru
          _
        // Predicated region
        $region25: #{tpu_custom_call.1} parent=19 // pred_check
          %p211 = pneg %p79
        $region26: #{tpu_custom_call.1} parent=19 // pred_check_branch
          %213 = sbr.rel (%p211) target = $region28
        $region27: #{tpu_custom_call.1} parent=19 // pred_region
          %s214 = sand.u32 %s19, 1
          %s215 = scalar_lea.sflag [#allocation6], %s214
          %s216 = sand.u32 %s69, 1
          %s217 = scalar_lea.vmem [#allocation5], %s216
          %s219 = ssub.s32 16, 16
          %220 = vsyncadd %s215, %s219
          %s221 = smul.addr %s26, 16
          %s222 = scalar_lea.hbm %s1, %s221
          %s224 = sshll.u32 %s217, 4
          %s225 = int_to_ptr.vmem [resolvable:$true] %s224
          %227 = dma.hbm_to_vmem [thread:$0]  %s222, 16, %s225, %s215
        $region28: #{tpu_custom_call.1} parent=19 // pred_fallthru
          _
        // Predicated region
        $region29: #{tpu_custom_call.1} parent=19 // pred_check
          %p228 = pneg %p105
        $region30: #{tpu_custom_call.1} parent=19 // pred_check_branch
          %230 = sbr.rel (%p228) target = $region32
        $region31: #{tpu_custom_call.1} parent=19 // pred_region
          %p231 = scmp.lt.s32.totalorder %s26, 1
          %s232 = scalar_select %p231, %s26, 1
          %s233 = scalar_lea.vmem %s2, %s232
        $region32: #{tpu_custom_call.1} parent=19 // pred_fallthru
          _
      $region20: #{tpu_custom_call.1} parent=5 // pred_fallthru
        _
      %p234 = scmp.le.s32.totalorder 1, %s19
      %p235 = scmp.lt.s32.totalorder %s19, 3
      %p236 = pnand %p234, %p235
      %p237 = pneg %p236
      // Predicated region
      $region33: #{tpu_custom_call.1} parent=5 // pred_check
        _
      $region34: #{tpu_custom_call.1} parent=5 // pred_check_branch
        %239 = sbr.rel (%p236) target = $region36
      $region35: #{tpu_custom_call.1} parent=5 // pred_region
        %s240 = ssub.s32 %s19, 1
        %s241 = sand.u32 %s46, 1
        %s242 = scalar_lea.sflag [#allocation3], %s241
        %s243 = sand.u32 %s46, 1
        %s244 = smul.addr %s243, 8
        %s245 = scalar_lea.vmem [#allocation2], %s244
        // Predicated region
        $region37: #{tpu_custom_call.1} parent=35 // pred_check
          %p246 = pneg %p59
        $region38: #{tpu_custom_call.1} parent=35 // pred_check_branch
          %248 = sbr.rel (%p246) target = $region40
        $region39: #{tpu_custom_call.1} parent=35 // pred_region
          %249 = dma.done %s242, 128
        $region40: #{tpu_custom_call.1} parent=35 // pred_fallthru
          _
        %s250 = sand.u32 %s24, 1
        %s251 = scalar_lea.sflag [#allocation6], %s250
        %s252 = sand.u32 %s72, 1
        %s253 = scalar_lea.vmem [#allocation5], %s252
        // Predicated region
        $region41: #{tpu_custom_call.1} parent=35 // pred_check
          %p254 = pneg %p85
        $region42: #{tpu_custom_call.1} parent=35 // pred_check_branch
          %256 = sbr.rel (%p254) target = $region44
        $region43: #{tpu_custom_call.1} parent=35 // pred_region
          %257 = dma.done %s251, 16
        $region44: #{tpu_custom_call.1} parent=35 // pred_fallthru
          _
        // Predicated region
        $region45: #{tpu_custom_call.1} parent=35 // pred_check
          %p258 = pneg %p132
        $region46: #{tpu_custom_call.1} parent=35 // pred_check_branch
          %260 = sbr.rel (%p258) target = $region48
        $region47: #{tpu_custom_call.1} parent=35 // pred_region
          %261 = dma.done [#allocation6], 512
        $region48: #{tpu_custom_call.1} parent=35 // pred_fallthru
          _
        %s262 = sand.u32 %s46, 1
        %s263 = scalar_lea.sflag [#allocation3], %s262
        %s264 = sand.u32 %s46, 1
        %s265 = smul.addr %s264, 8
        %s266 = scalar_lea.vmem [#allocation2], %s265
        %p267 = pneg %p59
        %p268 = pneg %p56
        %s269 = sand.u32 %s24, 1
        %s270 = scalar_lea.sflag [#allocation6], %s269
        %s271 = sand.u32 %s72, 1
        %s272 = scalar_lea.vmem [#allocation5], %s271
        %p273 = pneg %p85
        %p274 = pneg %p82
        %p275 = scmp.lt.s32.totalorder %s28, 1
        %s276 = scalar_select %p275, %s28, 1
        %s277 = scalar_lea.vmem %s2, %s276
        %p278 = pneg %p111
        %p279 = pneg %p108
        %p280 = pneg %p132
        %p281 = pneg %p129
        %p282 = pneg %p160
        %p283 = pneg %p157
        %s284 = sand.u32 %s147, 1
        %s285 = scalar_lea.sflag [#allocation4], %s284
        %s286 = sand.u32 %s147, 1
        %s287 = smul.addr %s286, 8
        %s288 = scalar_lea.vmem [#allocation8], %s287
        %p289 = scmp.lt.s32.totalorder %s28, 1
        %s290 = scalar_select %p289, %s28, 1
        %s291 = scalar_lea.vmem %s2, %s290
        %v292 = vld [vmem:[%s245] sm:$0xff]
        %v293 = vld [vmem:[#allocation7] sm:$0xff]
        %v294 = vld [vmem:[#allocation7 + $0x8] sm:$0xff]
        %v295 = vld [vmem:[#allocation7 + $0x10] sm:$0xff]
        %v296 = vld [vmem:[#allocation7 + $0x18] sm:$0xff]
        %v297 = vld [vmem:[%s291] sm:$0x1]
        %v299 = vlaneseq
        %v300 = vshrl.u32 %v299, 7
        %v301 = vsub.s32 0, %v300
        %v302 = vrot.slane %v297, %v301
        %vm304 = vcmask 261120
        %v306 = vsel %vm304, %v292, 0
        %308 = vmatprep.subr.mxu0 0.0
        %309 = vmatpush1.msra.mxu0 0.0
        %310 = vmatprep.subr.mxu0 0.0
        %311 = vmatpush1.msra.mxu0 0.0
        %312 = vmatprep.subr.mxu0 0.0
        %313 = vmatpush1.msra.mxu0 0.0
        %314 = vmatprep.subr.mxu0 0.0
        %315 = vmatpush1.msra.mxu0 0.0
        %316 = vmatprep.subr.mxu0 0.0
        %317 = vmatpush1.msra.mxu0 0.0
        %318 = vmatprep.subr.mxu0 0.0
        %319 = vmatpush1.msra.mxu0 0.0
        %320 = vmatprep.subr.mxu0 0.0
        %321 = vmatpush1.msra.mxu0 0.0
        %322 = vmatprep.subr.mxu0 0.0
        %323 = vmatpush1.msra.mxu0 0.0
        %324 = vmatprep.subr.mxu0 0.0
        %325 = vmatpush1.msra.mxu0 0.0
        %326 = vmatprep.subr.mxu0 0.0
        %327 = vmatpush1.msra.mxu0 0.0
        %328 = vmatprep.subr.mxu0 0.0
        %329 = vmatpush1.msra.mxu0 0.0
        %330 = vmatprep.subr.mxu0 0.0
        %331 = vmatpush1.msra.mxu0 0.0
        %332 = vmatprep.subr.mxu0 0.0
        %333 = vmatpush1.msra.mxu0 %v296
        %334 = vmatprep.subr.mxu0 0.0
        %335 = vmatpush1.msra.mxu0 %v295
        %336 = vmatprep.subr.mxu0 0.0
        %337 = vmatpush1.msra.mxu0 %v294
        %338 = vmatprep.subr.mxu0 0.0
        %339 = vmatpush1.msra.mxu0 %v293
        %340 = vmatprep.subr.mxu0 0.0
        %341 = vmatpush2.msra.mxu0 0.0
        %342 = vmatprep.subr.mxu0 0.0
        %343 = vmatpush2.msra.mxu0 0.0
        %344 = vmatprep.subr.mxu0 0.0
        %345 = vmatpush2.msra.mxu0 0.0
        %346 = vmatprep.subr.mxu0 0.0
        %347 = vmatpush2.msra.mxu0 0.0
        %348 = vmatprep.subr.mxu0 0.0
        %349 = vmatpush2.msra.mxu0 0.0
        %350 = vmatprep.subr.mxu0 0.0
        %351 = vmatpush2.msra.mxu0 0.0
        %352 = vmatprep.subr.mxu0 0.0
        %353 = vmatpush2.msra.mxu0 0.0
        %354 = vmatprep.subr.mxu0 0.0
        %355 = vmatpush2.msra.mxu0 0.0
        %356 = vmatprep.subr.mxu0 0.0
        %357 = vmatpush2.msra.mxu0 0.0
        %358 = vmatprep.subr.mxu0 0.0
        %359 = vmatpush2.msra.mxu0 0.0
        %360 = vmatprep.subr.mxu0 0.0
        %361 = vmatpush2.msra.mxu0 0.0
        %362 = vmatprep.subr.mxu0 0.0
        %363 = vmatpush2.msra.mxu0 0.0
        %364 = vmatprep.subr.mxu0 0.0
        %365 = vmatpush2.msra.mxu0 0.0
        %366 = vmatprep.subr.mxu0 0.0
        %367 = vmatpush2.msra.mxu0 0.0
        %368 = vmatprep.subr.mxu0 0.0
        %369 = vmatpush2.msra.mxu0 0.0
        %370 = vmatprep.subr.mxu0 0.0
        %371 = vmatpush2.msra.mxu0 0.0
        %372 = vmatprep.mubr.f32.mxu0 0.0
        %373 = vmatmul.mubr.f32.gmra.mxu0 %v306
        %v374 = vpop.f32.mrf.mxu0
        %v375 = vadd.f32 %v302, %v374
        %v376 = vpop.f32.mrf.mxu0
        %377 = vdwg.mxu0
        %v378 = vxor.u32 %v375, 2147483648
        %v379 = vmul.f32 %v378, 1.442695
        %v380 = vpow.pop %v379
        %v381 = vadd.f32 %v380, 1.0
        %v382 = vrcp.pop %v381
        %v383 = vmul.f32 1.0, %v382
        %v384 = vld [vmem:[%s253] sm:$0x1]
        %v386 = vlaneseq
        %v387 = vshrl.u32 %v386, 7
        %v388 = vsub.s32 0, %v387
        %v389 = vrot.slane %v384, %v388
        %v391 = vsub.f32 %v389, %v292
        %v392 = vmul.f32 %v383, %v391
        %v393 = vadd.f32 %v292, %v392
        %394 = vst.msk [vmem:[%s288] sm:$0xff] %vm304, %v393
        %s395 = sand.u32 %s147, 1
        %s396 = scalar_lea.sflag [#allocation4], %s395
        %s397 = sand.u32 %s147, 1
        %s398 = smul.addr %s397, 8
        %s399 = scalar_lea.vmem [#allocation8], %s398
        // Predicated region
        $region49: #{tpu_custom_call.1} parent=35 // pred_check
          %p400 = pneg %p157
        $region50: #{tpu_custom_call.1} parent=35 // pred_check_branch
          %402 = sbr.rel (%p400) target = $region52
        $region51: #{tpu_custom_call.1} parent=35 // pred_region
          %s404 = ssub.s32 128, 128
          %405 = vsyncadd %s396, %s404
          %s406 = sadd.s32 %s29, %s28
          %s407 = smul.addr %s406, 128
          %s408 = scalar_lea.hbm %s4, %s407
          %s410 = sshll.u32 %s399, 4
          %s411 = int_to_ptr.vmem [resolvable:$true] %s410
          %413 = dma.vmem_to_hbm [thread:$0]  %s411, 128, %s408, %s396
        $region52: #{tpu_custom_call.1} parent=35 // pred_fallthru
          _
      $region36: #{tpu_custom_call.1} parent=5 // pred_fallthru
        _
      %p414 = scmp.le.s32.totalorder 2, %s19
      // Predicated region
      $region53: #{tpu_custom_call.1} parent=5 // pred_check
        %p415 = pneg %p414
      $region54: #{tpu_custom_call.1} parent=5 // pred_check_branch
        %417 = sbr.rel (%p415) target = $region56
      $region55: #{tpu_custom_call.1} parent=5 // pred_region
        %s418 = ssub.s32 %s19, 2
        // Predicated region
        $region57: #{tpu_custom_call.1} parent=55 // pred_check
          %p419 = pneg %p163
        $region58: #{tpu_custom_call.1} parent=55 // pred_check_branch
          %421 = sbr.rel (%p419) target = $region60
        $region59: #{tpu_custom_call.1} parent=55 // pred_region
          %s422 = sand.u32 %s148, 1
          %s423 = scalar_lea.sflag [#allocation4], %s422
          %s424 = sand.u32 %s148, 1
          %s425 = smul.addr %s424, 8
          %s426 = scalar_lea.vmem [#allocation8], %s425
          %427 = dma.done %s423, 128
        $region60: #{tpu_custom_call.1} parent=55 // pred_fallthru
          _
      $region56: #{tpu_custom_call.1} parent=5 // pred_fallthru
        _
    $region6: #{tpu_custom_call.1} parent=1 // loop_footer
      %s23 = sadd.s32 1, %s19
    $region7: #{tpu_custom_call.1} parent=1 // loop_footer_branch
      %18 = sbr.rel target = $region3
    $region8: #{tpu_custom_call.1} parent=1 // loop_exit
      _
    %428 = vsyncpa [#allocation3], 1
    %s429 = scalar_lea.sflag [#allocation3], 1
    %430 = vsyncpa %s429, 1
    %431 = vsyncpa [#allocation6], 1
    %s432 = scalar_lea.sflag [#allocation6], 1
    %433 = vsyncpa %s432, 1
    %434 = vsyncpa [#allocation4], 1
    %s435 = scalar_lea.sflag [#allocation4], 1
    %436 = vsyncpa %s435, 1

// kernel: tpu_custom_call.1
$region0: #{tpu_custom_call.1}
  #allocation0 [shape = 'u32[]', space=smem, size = 0x4, offset = 0x4, fixed_abs, tag = 'smem constant byte address 0x4 - core index']
  #allocation1 [shape = 'u32[144,128]{1,0:T(1,128)}', space=vmem, size = 0x12000, scoped, tag = 'internal scratch']
  %s0 = inlined_call_operand.hbm [shape: f32[2,8,32], index: 0, kind: input, shape index: {}]
  %s1 = inlined_call_operand.hbm [shape: f32[2,1,32], index: 1, kind: input, shape index: {}]
  %s2 = inlined_call_operand.vmem [shape: f32[2,1,32], index: 2, kind: input, shape index: {}]
  %s3 = inlined_call_operand.hbm [shape: f32[32,32], index: 3, kind: input, shape index: {}]
  %s4 = inlined_call_operand.hbm [shape: f32[2,8,32], index: 4, kind: output, shape index: {}]
  %s5 = sld [smem:[#allocation0]]
  $region61: #{tpu_custom_call.1} parent=0
    _
  %s7 = ssub.s32 1, %s5
  %s8 = scalar_select 0, %s7, %s5
  $region1: #{tpu_custom_call.1} parent=0
    #allocation2 [shape = 'u8[8192]{0}', space=vmem, size = 0x2000, scoped, tag = 'input window, operand 0']
    #allocation3 [shape = 's32[2]{0}', space=sflag, size = 0x8, scoped, tag = 'scoped memory for tpu_custom_call.1']
    #allocation4 [shape = 's32[2]{0}', space=sflag, size = 0x8, scoped, tag = 'scoped memory for tpu_custom_call.1']
    #allocation5 [shape = 'u8[1024]{0}', space=vmem, size = 0x400, scoped, tag = 'input window, operand 1']
    #allocation6 [shape = 's32[2]{0}', space=sflag, size = 0x8, scoped, tag = 'scoped memory for tpu_custom_call.1']
    #allocation7 [shape = 'u8[16384]{0}', space=vmem, size = 0x4000, scoped, tag = 'input window, operand 3, single buffered']
    #allocation8 [shape = 'u8[8192]{0}', space=vmem, size = 0x2000, scoped, tag = 'output window, operand 0']
    %9 = vsyncpa [#allocation3], 0
    %s10 = scalar_lea.sflag [#allocation3], 1
    %11 = vsyncpa %s10, 0
    %12 = vsyncpa [#allocation6], 0
    %s13 = scalar_lea.sflag [#allocation6], 1
    %14 = vsyncpa %s13, 0
    %15 = vsyncpa [#allocation4], 0
    %s16 = scalar_lea.sflag [#allocation4], 1
    %17 = vsyncpa %s16, 0
    loop: start=0, step=1, limit=4
    $region2: #{tpu_custom_call.1} parent=1 // loop_pre_header
      _
    $region3: #{tpu_custom_call.1} parent=1 // loop_header
      %s19 = sphi 0, %s23
      %p20 = scmp.ge.s32.totalorder %s19, 4
      %s26 = sphi 0, %s38
      %s27 = sphi 0, %s34
      %s28 = sphi 0, %s26
      %s29 = sphi 0, %s27
      %s30 = sphi 0, %s28
      %s31 = sphi 0, %s29
      %s43 = sphi 0, %s45
      %s46 = sphi 0, %s43
      %s47 = sphi 0, %s46
      %s63 = sphi 0, %s47
      %s69 = sphi 0, %s71
      %s72 = sphi 0, %s69
      %s73 = sphi 0, %s72
      %s89 = sphi 0, %s73
      %s95 = sphi 0, %s97
      %s98 = sphi 0, %s95
      %s99 = sphi 0, %s98
      %s115 = sphi 0, %s99
      %s119 = sphi 0, %s119
      %s121 = sphi 0, %s119
      %s122 = sphi 0, %s121
      %s136 = sphi 0, %s122
      %s144 = sphi 0, %s146
      %s147 = sphi 0, %s144
      %s148 = sphi 0, %s147
      %s164 = sphi 0, %s148
    $region4: #{tpu_custom_call.1} parent=1 // loop_header_branch
      %22 = sbr.rel (%p20) target = $region8
    $region5: #{tpu_custom_call.1} parent=1 // loop_body
      %s24 = ssub.s32 %s19, 1
      %s25 = ssub.s32 %s19, 2
      %s32 = sadd.s32 1, %s27
      %p33 = scmp.ge.s32.totalorder %s32, 1
      %s34 = scalar_select %p33, 0, %s32
      %s35 = sadd.s32 1, %s26
      %s36 = scalar_select %p33, %s35, %s26
      %p37 = scmp.ge.s32.totalorder %s36, 2
      %s38 = scalar_select %p37, 0, %s36
      %s39 = ssub.s32 %s26, %s38
      %s40 = ssub.s32 %s27, %s34
      %s41 = sor.u32 %s39, %s40
      %p42 = scmp.eq.s32.totalorder %s41, 0
      %s44 = sadd.s32 %s43, 1
      %s45 = scalar_select %p42, %s43, %s44
      %p48 = pneg %p42
      %p49 = scmp.eq.s32.totalorder %s19, 1
      %p50 = por %p48, %p49
      %p51 = scmp.ne.s32.totalorder %s43, %s46
      %p52 = scmp.eq.s32.totalorder %s19, 0
      %p53 = por %p51, %p52
      %p54 = scmp.ne.s32.totalorder %s43, %s46
      %p55 = scmp.eq.s32.totalorder %s24, 1
      %p56 = por %p54, %p55
      %p57 = scmp.ne.s32.totalorder %s46, %s47
      %p58 = scmp.eq.s32.totalorder %s24, 0
      %p59 = por %p57, %p58
      %p60 = scmp.ne.s32.totalorder %s46, %s47
      %p61 = scmp.eq.s32.totalorder %s25, 1
      %p62 = por %p60, %p61
      %p64 = scmp.ne.s32.totalorder %s47, %s63
      %p65 = scmp.eq.s32.totalorder %s25, 0
      %p66 = por %p64, %p65
      %s67 = ssub.s32 %s26, %s38
      %p68 = scmp.eq.s32.totalorder %s67, 0
      %s70 = sadd.s32 %s69, 1
      %s71 = scalar_select %p68, %s69, %s70
      %p74 = pneg %p68
      %p75 = scmp.eq.s32.totalorder %s19, 1
      %p76 = por %p74, %p75
      %p77 = scmp.ne.s32.totalorder %s69, %s72
      %p78 = scmp.eq.s32.totalorder %s19, 0
      %p79 = por %p77, %p78
      %p80 = scmp.ne.s32.totalorder %s69, %s72
      %p81 = scmp.eq.s32.totalorder %s24, 1
      %p82 = por %p80, %p81
      %p83 = scmp.ne.s32.totalorder %s72, %s73
      %p84 = scmp.eq.s32.totalorder %s24, 0
      %p85 = por %p83, %p84
      %p86 = scmp.ne.s32.totalorder %s72, %s73
      %p87 = scmp.eq.s32.totalorder %s25, 1
      %p88 = por %p86, %p87
      %p90 = scmp.ne.s32.totalorder %s73, %s89
      %p91 = scmp.eq.s32.totalorder %s25, 0
      %p92 = por %p90, %p91
      %s93 = ssub.s32 %s26, %s38
      %p94 = scmp.eq.s32.totalorder %s93, 0
      %s96 = sadd.s32 %s95, 1
      %s97 = scalar_select %p94, %s95, %s96
      %p100 = pneg %p94
      %p101 = scmp.eq.s32.totalorder %s19, 1
      %p102 = por %p100, %p101
      %p103 = scmp.ne.s32.totalorder %s95, %s98
      %p104 = scmp.eq.s32.totalorder %s19, 0
      %p105 = por %p103, %p104
      %p106 = scmp.ne.s32.totalorder %s95, %s98
      %p107 = scmp.eq.s32.totalorder %s24, 1
      %p108 = por %p106, %p107
      %p109 = scmp.ne.s32.totalorder %s98, %s99
      %p110 = scmp.eq.s32.totalorder %s24, 0
      %p111 = por %p109, %p110
      %p112 = scmp.ne.s32.totalorder %s98, %s99
      %p113 = scmp.eq.s32.totalorder %s25, 1
      %p114 = por %p112, %p113
      %p116 = scmp.ne.s32.totalorder %s99, %s115
      %p117 = scmp.eq.s32.totalorder %s25, 0
      %p118 = por %p116, %p117
      %s120 = sadd.s32 %s119, 1
      %p123 = scmp.eq.s32.totalorder %s19, 1
      %p124 = scmp.ne.s32.totalorder %s119, %s121
      %p125 = scmp.eq.s32.totalorder %s19, 0
      %p126 = por %p124, %p125
      %p127 = scmp.ne.s32.totalorder %s119, %s121
      %p128 = scmp.eq.s32.totalorder %s24, 1
      %p129 = por %p127, %p128
      %p130 = scmp.ne.s32.totalorder %s121, %s122
      %p131 = scmp.eq.s32.totalorder %s24, 0
      %p132 = por %p130, %p131
      %p133 = scmp.ne.s32.totalorder %s121, %s122
      %p134 = scmp.eq.s32.totalorder %s25, 1
      %p135 = por %p133, %p134
      %p137 = scmp.ne.s32.totalorder %s122, %s136
      %p138 = scmp.eq.s32.totalorder %s25, 0
      %p139 = por %p137, %p138
      %s140 = ssub.s32 %s26, %s38
      %s141 = ssub.s32 %s27, %s34
      %s142 = sor.u32 %s140, %s141
      %p143 = scmp.eq.s32.totalorder %s142, 0
      %s145 = sadd.s32 %s144, 1
      %s146 = scalar_select %p143, %s144, %s145
      %p149 = pneg %p143
      %p150 = scmp.eq.s32.totalorder %s19, 1
      %p151 = por %p149, %p150
      %p152 = scmp.ne.s32.totalorder %s144, %s147
      %p153 = scmp.eq.s32.totalorder %s19, 0
      %p154 = por %p152, %p153
      %p155 = scmp.ne.s32.totalorder %s144, %s147
      %p156 = scmp.eq.s32.totalorder %s24, 1
      %p157 = por %p155, %p156
      %p158 = scmp.ne.s32.totalorder %s147, %s148
      %p159 = scmp.eq.s32.totalorder %s24, 0
      %p160 = por %p158, %p159
      %p161 = scmp.ne.s32.totalorder %s147, %s148
      %p162 = scmp.eq.s32.totalorder %s25, 1
      %p163 = por %p161, %p162
      %p165 = scmp.ne.s32.totalorder %s148, %s164
      %p166 = scmp.eq.s32.totalorder %s25, 0
      %p167 = por %p165, %p166
      %p168 = scmp.le.s32.totalorder 1, %s19
      %p169 = scmp.lt.s32.totalorder %s19, 3
      %p170 = pnand %p168, %p169
      %p171 = pneg %p170
      // Predicated region
      $region9: #{tpu_custom_call.1} parent=5 // pred_check
        _
      $region10: #{tpu_custom_call.1} parent=5 // pred_check_branch
        %173 = sbr.rel (%p170) target = $region12
      $region11: #{tpu_custom_call.1} parent=5 // pred_region
        %s174 = ssub.s32 %s19, 1
        // Predicated region
        $region13: #{tpu_custom_call.1} parent=11 // pred_check
          %p175 = pneg %p132
        $region14: #{tpu_custom_call.1} parent=11 // pred_check_branch
          %177 = sbr.rel (%p175) target = $region16
        $region15: #{tpu_custom_call.1} parent=11 // pred_region
          %s179 = ssub.s32 512, 512
          %180 = vsyncadd [#allocation6], %s179
          %s181 = sshll.u32 [#allocation7], 4
          %s182 = int_to_ptr.vmem [resolvable:$true] %s181
          %187 = dma.hbm_to_vmem [thread:$0]  %s3, 512, %s182, [#allocation6], 128, 128, 8
        $region16: #{tpu_custom_call.1} parent=11 // pred_fallthru
          _
      $region12: #{tpu_custom_call.1} parent=5 // pred_fallthru
        _
      %p188 = scmp.lt.s32.totalorder %s19, 2
      // Predicated region
      $region17: #{tpu_custom_call.1} parent=5 // pred_check
        %p189 = pneg %p188
      $region18: #{tpu_custom_call.1} parent=5 // pred_check_branch
        %191 = sbr.rel (%p189) target = $region20
      $region19: #{tpu_custom_call.1} parent=5 // pred_region
        // Predicated region
        $region21: #{tpu_custom_call.1} parent=19 // pred_check
          %p192 = pneg %p53
        $region22: #{tpu_custom_call.1} parent=19 // pred_check_branch
          %194 = sbr.rel (%p192) target = $region24
        $region23: #{tpu_custom_call.1} parent=19 // pred_region
          %s195 = sand.u32 %s43, 1
          %s196 = scalar_lea.sflag [#allocation3], %s195
          %s197 = sand.u32 %s43, 1
          %s198 = smul.addr %s197, 8
          %s199 = scalar_lea.vmem [#allocation2], %s198
          %s201 = ssub.s32 128, 128
          %202 = vsyncadd %s196, %s201
          %s203 = sadd.s32 %s27, %s26
          %s204 = smul.addr %s203, 128
          %s205 = scalar_lea.hbm %s0, %s204
          %s207 = sshll.u32 %s199, 4
          %s208 = int_to_ptr.vmem [resolvable:$true] %s207
          %210 = dma.hbm_to_vmem [thread:$0]  %s205, 128, %s208, %s196
        $region24: #{tpu_custom_call.1} parent=19 // pred_fallthru
          _
        // Predicated region
        $region25: #{tpu_custom_call.1} parent=19 // pred_check
          %p211 = pneg %p79
        $region26: #{tpu_custom_call.1} parent=19 // pred_check_branch
          %213 = sbr.rel (%p211) target = $region28
        $region27: #{tpu_custom_call.1} parent=19 // pred_region
          %s214 = sand.u32 %s19, 1
          %s215 = scalar_lea.sflag [#allocation6], %s214
          %s216 = sand.u32 %s69, 1
          %s217 = scalar_lea.vmem [#allocation5], %s216
          %s219 = ssub.s32 16, 16
          %220 = vsyncadd %s215, %s219
          %s221 = smul.addr %s26, 16
          %s222 = scalar_lea.hbm %s1, %s221
          %s224 = sshll.u32 %s217, 4
          %s225 = int_to_ptr.vmem [resolvable:$true] %s224
          %227 = dma.hbm_to_vmem [thread:$0]  %s222, 16, %s225, %s215
        $region28: #{tpu_custom_call.1} parent=19 // pred_fallthru
          _
        // Predicated region
        $region29: #{tpu_custom_call.1} parent=19 // pred_check
          %p228 = pneg %p105
        $region30: #{tpu_custom_call.1} parent=19 // pred_check_branch
          %230 = sbr.rel (%p228) target = $region32
        $region31: #{tpu_custom_call.1} parent=19 // pred_region
          %p231 = scmp.lt.s32.totalorder %s26, 1
          %s232 = scalar_select %p231, %s26, 1
          %s233 = scalar_lea.vmem %s2, %s232
        $region32: #{tpu_custom_call.1} parent=19 // pred_fallthru
          _
      $region20: #{tpu_custom_call.1} parent=5 // pred_fallthru
        _
      %p234 = scmp.le.s32.totalorder 1, %s19
      %p235 = scmp.lt.s32.totalorder %s19, 3
      %p236 = pnand %p234, %p235
      %p237 = pneg %p236
      // Predicated region
      $region33: #{tpu_custom_call.1} parent=5 // pred_check
        _
      $region34: #{tpu_custom_call.1} parent=5 // pred_check_branch
        %239 = sbr.rel (%p236) target = $region36
      $region35: #{tpu_custom_call.1} parent=5 // pred_region
        %s240 = ssub.s32 %s19, 1
        %s241 = sand.u32 %s46, 1
        %s242 = scalar_lea.sflag [#allocation3], %s241
        %s243 = sand.u32 %s46, 1
        %s244 = smul.addr %s243, 8
        %s245 = scalar_lea.vmem [#allocation2], %s244
        // Predicated region
        $region37: #{tpu_custom_call.1} parent=35 // pred_check
          %p246 = pneg %p59
        $region38: #{tpu_custom_call.1} parent=35 // pred_check_branch
          %248 = sbr.rel (%p246) target = $region40
        $region39: #{tpu_custom_call.1} parent=35 // pred_region
          %249 = dma.done %s242, 128
        $region40: #{tpu_custom_call.1} parent=35 // pred_fallthru
          _
        %s250 = sand.u32 %s24, 1
        %s251 = scalar_lea.sflag [#allocation6], %s250
        %s252 = sand.u32 %s72, 1
        %s253 = scalar_lea.vmem [#allocation5], %s252
        // Predicated region
        $region41: #{tpu_custom_call.1} parent=35 // pred_check
          %p254 = pneg %p85
        $region42: #{tpu_custom_call.1} parent=35 // pred_check_branch
          %256 = sbr.rel (%p254) target = $region44
        $region43: #{tpu_custom_call.1} parent=35 // pred_region
          %257 = dma.done %s251, 16
        $region44: #{tpu_custom_call.1} parent=35 // pred_fallthru
          _
        // Predicated region
        $region45: #{tpu_custom_call.1} parent=35 // pred_check
          %p258 = pneg %p132
        $region46: #{tpu_custom_call.1} parent=35 // pred_check_branch
          %260 = sbr.rel (%p258) target = $region48
        $region47: #{tpu_custom_call.1} parent=35 // pred_region
          %261 = dma.done [#allocation6], 512
        $region48: #{tpu_custom_call.1} parent=35 // pred_fallthru
          _
        %s262 = sand.u32 %s46, 1
        %s263 = scalar_lea.sflag [#allocation3], %s262
        %s264 = sand.u32 %s46, 1
        %s265 = smul.addr %s264, 8
        %s266 = scalar_lea.vmem [#allocation2], %s265
        %p267 = pneg %p59
        %p268 = pneg %p56
        %s269 = sand.u32 %s24, 1
        %s270 = scalar_lea.sflag [#allocation6], %s269
        %s271 = sand.u32 %s72, 1
        %s272 = scalar_lea.vmem [#allocation5], %s271
        %p273 = pneg %p85
        %p274 = pneg %p82
        %p275 = scmp.lt.s32.totalorder %s28, 1
        %s276 = scalar_select %p275, %s28, 1
        %s277 = scalar_lea.vmem %s2, %s276
        %p278 = pneg %p111
        %p279 = pneg %p108
        %p280 = pneg %p132
        %p281 = pneg %p129
        %p282 = pneg %p160
        %p283 = pneg %p157
        %s284 = sand.u32 %s147, 1
        %s285 = scalar_lea.sflag [#allocation4], %s284
        %s286 = sand.u32 %s147, 1
        %s287 = smul.addr %s286, 8
        %s288 = scalar_lea.vmem [#allocation8], %s287
        %p289 = scmp.lt.s32.totalorder %s28, 1
        %s290 = scalar_select %p289, %s28, 1
        %s291 = scalar_lea.vmem %s2, %s290
        %v292 = vld [vmem:[%s245] sm:$0xff]
        %v293 = vld [vmem:[#allocation7] sm:$0xff]
        %v294 = vld [vmem:[#allocation7 + $0x8] sm:$0xff]
        %v295 = vld [vmem:[#allocation7 + $0x10] sm:$0xff]
        %v296 = vld [vmem:[#allocation7 + $0x18] sm:$0xff]
        %v297 = vld [vmem:[%s291] sm:$0x1]
        %v299 = vlaneseq
        %v300 = vshrl.u32 %v299, 7
        %v301 = vsub.s32 0, %v300
        %v302 = vrot.slane %v297, %v301
        %vm304 = vcmask 261120
        %v306 = vsel %vm304, %v292, 0
        %308 = vmatprep.subr.mxu0 0.0
        %309 = vmatpush1.msra.mxu0 0.0
        %310 = vmatprep.subr.mxu0 0.0
        %311 = vmatpush1.msra.mxu0 0.0
        %312 = vmatprep.subr.mxu0 0.0
        %313 = vmatpush1.msra.mxu0 0.0
        %314 = vmatprep.subr.mxu0 0.0
        %315 = vmatpush1.msra.mxu0 0.0
        %316 = vmatprep.subr.mxu0 0.0
        %317 = vmatpush1.msra.mxu0 0.0
        %318 = vmatprep.subr.mxu0 0.0
        %319 = vmatpush1.msra.mxu0 0.0
        %320 = vmatprep.subr.mxu0 0.0
        %321 = vmatpush1.msra.mxu0 0.0
        %322 = vmatprep.subr.mxu0 0.0
        %323 = vmatpush1.msra.mxu0 0.0
        %324 = vmatprep.subr.mxu0 0.0
        %325 = vmatpush1.msra.mxu0 0.0
        %326 = vmatprep.subr.mxu0 0.0
        %327 = vmatpush1.msra.mxu0 0.0
        %328 = vmatprep.subr.mxu0 0.0
        %329 = vmatpush1.msra.mxu0 0.0
        %330 = vmatprep.subr.mxu0 0.0
        %331 = vmatpush1.msra.mxu0 0.0
        %332 = vmatprep.subr.mxu0 0.0
        %333 = vmatpush1.msra.mxu0 %v296
        %334 = vmatprep.subr.mxu0 0.0
        %335 = vmatpush1.msra.mxu0 %v295
        %336 = vmatprep.subr.mxu0 0.0
        %337 = vmatpush1.msra.mxu0 %v294
        %338 = vmatprep.subr.mxu0 0.0
        %339 = vmatpush1.msra.mxu0 %v293
        %340 = vmatprep.subr.mxu0 0.0
        %341 = vmatpush2.msra.mxu0 0.0
        %342 = vmatprep.subr.mxu0 0.0
        %343 = vmatpush2.msra.mxu0 0.0
        %344 = vmatprep.subr.mxu0 0.0
        %345 = vmatpush2.msra.mxu0 0.0
        %346 = vmatprep.subr.mxu0 0.0
        %347 = vmatpush2.msra.mxu0 0.0
        %348 = vmatprep.subr.mxu0 0.0
        %349 = vmatpush2.msra.mxu0 0.0
        %350 = vmatprep.subr.mxu0 0.0
        %351 = vmatpush2.msra.mxu0 0.0
        %352 = vmatprep.subr.mxu0 0.0
        %353 = vmatpush2.msra.mxu0 0.0
        %354 = vmatprep.subr.mxu0 0.0
        %355 = vmatpush2.msra.mxu0 0.0
        %356 = vmatprep.subr.mxu0 0.0
        %357 = vmatpush2.msra.mxu0 0.0
        %358 = vmatprep.subr.mxu0 0.0
        %359 = vmatpush2.msra.mxu0 0.0
        %360 = vmatprep.subr.mxu0 0.0
        %361 = vmatpush2.msra.mxu0 0.0
        %362 = vmatprep.subr.mxu0 0.0
        %363 = vmatpush2.msra.mxu0 0.0
        %364 = vmatprep.subr.mxu0 0.0
        %365 = vmatpush2.msra.mxu0 0.0
        %366 = vmatprep.subr.mxu0 0.0
        %367 = vmatpush2.msra.mxu0 0.0
        %368 = vmatprep.subr.mxu0 0.0
        %369 = vmatpush2.msra.mxu0 0.0
        %370 = vmatprep.subr.mxu0 0.0
        %371 = vmatpush2.msra.mxu0 0.0
        %372 = vmatprep.mubr.f32.mxu0 0.0
        %373 = vmatmul.mubr.f32.gmra.mxu0 %v306
        %v374 = vpop.f32.mrf.mxu0
        %v375 = vadd.f32 %v302, %v374
        %v376 = vpop.f32.mrf.mxu0
        %377 = vdwg.mxu0
        %v378 = vxor.u32 %v375, 2147483648
        %v379 = vmul.f32 %v378, 1.442695
        %v380 = vpow.pop %v379
        %v381 = vadd.f32 %v380, 1.0
        %v382 = vrcp.pop %v381
        %v383 = vmul.f32 1.0, %v382
        %v384 = vld [vmem:[%s253] sm:$0x1]
        %v386 = vlaneseq
        %v387 = vshrl.u32 %v386, 7
        %v388 = vsub.s32 0, %v387
        %v389 = vrot.slane %v384, %v388
        %v391 = vsub.f32 %v389, %v292
        %v392 = vmul.f32 %v383, %v391
        %v393 = vadd.f32 %v292, %v392
        %394 = vst.msk [vmem:[%s288] sm:$0xff] %vm304, %v393
        %s395 = sand.u32 %s147, 1
        %s396 = scalar_lea.sflag [#allocation4], %s395
        %s397 = sand.u32 %s147, 1
        %s398 = smul.addr %s397, 8
        %s399 = scalar_lea.vmem [#allocation8], %s398
        // Predicated region
        $region49: #{tpu_custom_call.1} parent=35 // pred_check
          %p400 = pneg %p157
        $region50: #{tpu_custom_call.1} parent=35 // pred_check_branch
          %402 = sbr.rel (%p400) target = $region52
        $region51: #{tpu_custom_call.1} parent=35 // pred_region
          %s404 = ssub.s32 128, 128
          %405 = vsyncadd %s396, %s404
          %s406 = sadd.s32 %s29, %s28
          %s407 = smul.addr %s406, 128
          %s408 = scalar_lea.hbm %s4, %s407
          %s410 = sshll.u32 %s399, 4
          %s411 = int_to_ptr.vmem [resolvable:$true] %s410
          %413 = dma.vmem_to_hbm [thread:$0]  %s411, 128, %s408, %s396
        $region52: #{tpu_custom_call.1} parent=35 // pred_fallthru
          _
      $region36: #{tpu_custom_call.1} parent=5 // pred_fallthru
        _
      %p414 = scmp.le.s32.totalorder 2, %s19
      // Predicated region
      $region53: #{tpu_custom_call.1} parent=5 // pred_check
        %p415 = pneg %p414
      $region54: #{tpu_custom_call.1} parent=5 // pred_check_branch
        %417 = sbr.rel (%p415) target = $region56
      $region55: #{tpu_custom_call.1} parent=5 // pred_region
        %s418 = ssub.s32 %s19, 2
        // Predicated region
        $region57: #{tpu_custom_call.1} parent=55 // pred_check
          %p419 = pneg %p163
        $region58: #{tpu_custom_call.1} parent=55 // pred_check_branch
          %421 = sbr.rel (%p419) target = $region60
        $region59: #{tpu_custom_call.1} parent=55 // pred_region
          %s422 = sand.u32 %s148, 1
          %s423 = scalar_lea.sflag [#allocation4], %s422
          %s424 = sand.u32 %s148, 1
          %s425 = smul.addr %s424, 8
          %s426 = scalar_lea.vmem [#allocation8], %s425
          %427 = dma.done %s423, 128
        $region60: #{tpu_custom_call.1} parent=55 // pred_fallthru
          _
      $region56: #{tpu_custom_call.1} parent=5 // pred_fallthru
        _
    $region6: #{tpu_custom_call.1} parent=1 // loop_footer
      %s23 = sadd.s32 1, %s19
    $region7: #{tpu_custom_call.1} parent=1 // loop_footer_branch
      %18 = sbr.rel target = $region3
    $region8: #{tpu_custom_call.1} parent=1 // loop_exit
      _
    %428 = vsyncpa [#allocation3], 1
    %s429 = scalar_lea.sflag [#allocation3], 1
    %430 = vsyncpa %s429, 1
    %431 = vsyncpa [#allocation6], 1
    %s432 = scalar_lea.sflag [#allocation6], 1
    %433 = vsyncpa %s432, 1
    %434 = vsyncpa [#allocation4], 1
    %s435 = scalar_lea.sflag [#allocation4], 1
    %436 = vsyncpa %s435, 1

</llo_original>
